<compile_context>
chip_gen: v7x
topology: tpu7x:2x2x1
jax: 0.10.0
libtpu: 0.0.40
codegen_flags: <defaults>
</compile_context>

<pallas_src>
import functools
import math

import jax
import jax.numpy as jnp
from jax import lax
from jax.experimental import pallas as pl
from jax.experimental.pallas import tpu as pltpu


# ----------------------------------------------------------------------------
# Kernel 1: per-channel batch statistics (mean, rstd) over (N, H, W).
# ----------------------------------------------------------------------------
def _bn_stats_kernel(x_ref, mean_ref, rstd_ref, *, count, eps):
    n = pl.program_id(0)

    @pl.when(n == 0)
    def _():
        mean_ref[...] = jnp.zeros_like(mean_ref)
        rstd_ref[...] = jnp.zeros_like(rstd_ref)

    x = x_ref[0]                                        # (C, HW) f32
    mean_ref[...] += jnp.sum(x, axis=1, keepdims=True)   # running sum
    rstd_ref[...] += jnp.sum(x * x, axis=1, keepdims=True)  # running sum of squares

    @pl.when(n == pl.num_programs(0) - 1)
    def _():
        inv = 1.0 / count
        mean = mean_ref[...] * inv
        var = jnp.maximum(rstd_ref[...] * inv - mean * mean, 0.0)
        mean_ref[...] = mean
        rstd_ref[...] = lax.rsqrt(var + eps)


def bn_stats(xr, eps=1e-5):
    # xr: (N, C, HW) f32  ->  mean (C,1), rstd (C,1)
    N, C, HW = xr.shape
    return pl.pallas_call(
        functools.partial(_bn_stats_kernel, count=float(N * HW), eps=float(eps)),
        grid=(N,),
        in_specs=[pl.BlockSpec((1, C, HW), lambda n: (n, 0, 0))],
        out_specs=[pl.BlockSpec((C, 1), lambda n: (0, 0)),
                   pl.BlockSpec((C, 1), lambda n: (0, 0))],
        out_shape=[jax.ShapeDtypeStruct((C, 1), jnp.float32),
                   jax.ShapeDtypeStruct((C, 1), jnp.float32)],
        compiler_params=pltpu.CompilerParams(
            dimension_semantics=("arbitrary",)),
    )(xr)


# ----------------------------------------------------------------------------
# Kernel 2: fused gamma/beta MLP + normalization + affine, one batch per step.
# ----------------------------------------------------------------------------
def _adain_apply_kernel(x_ref, z_ref, mean_ref, rstd_ref,
                        wg1_ref, bg1_ref, wg2_ref,
                        wb1_ref, bb1_ref, wb2_ref, o_ref):
    zc = z_ref[0].astype(jnp.bfloat16)                  # (Z, 1)

    def mlp(w1_ref, b1_ref, w2_ref):
        # Linear -> ReLU -> Linear(bias=False), torch-native (out, in) weights,
        # bf16 MXU matmuls with f32 accumulation, bias/ReLU in f32.
        h = jnp.dot(w1_ref[...], zc, preferred_element_type=jnp.float32)
        h = jnp.maximum(h + b1_ref[...], 0.0)           # (C, 1) f32
        return jnp.dot(w2_ref[...], h.astype(jnp.bfloat16),
                       preferred_element_type=jnp.float32)   # (C, 1) f32

    gamma = mlp(wg1_ref, bg1_ref, wg2_ref)              # (C, 1)
    beta = mlp(wb1_ref, bb1_ref, wb2_ref)               # (C, 1)

    scale = gamma * rstd_ref[...]                       # (C, 1)
    shift = beta - scale * mean_ref[...]                # (C, 1)
    o_ref[0] = x_ref[0] * scale + shift                 # (C, HW), lane-dense


def adain_apply(xr, z3, mean, rstd, params):
    N, C, HW = xr.shape
    Z = z3.shape[1]
    wg1 = params["wg1"].astype(jnp.bfloat16)            # (C, Z)
    wg2 = params["wg2"].astype(jnp.bfloat16)            # (C, C)
    wb1 = params["wb1"].astype(jnp.bfloat16)
    wb2 = params["wb2"].astype(jnp.bfloat16)
    bg1 = params["bg1"].reshape(C, 1).astype(jnp.float32)
    bb1 = params["bb1"].reshape(C, 1).astype(jnp.float32)

    const = lambda n: (0, 0)
    return pl.pallas_call(
        _adain_apply_kernel,
        grid=(N,),
        in_specs=[
            pl.BlockSpec((1, C, HW), lambda n: (n, 0, 0)),   # x block
            pl.BlockSpec((1, Z, 1), lambda n: (n, 0, 0)),    # z column for batch n
            pl.BlockSpec((C, 1), const),                     # mean
            pl.BlockSpec((C, 1), const),                     # rstd
            pl.BlockSpec((C, Z), const),                     # wg1 (resident)
            pl.BlockSpec((C, 1), const),                     # bg1
            pl.BlockSpec((C, C), const),                     # wg2
            pl.BlockSpec((C, Z), const),                     # wb1
            pl.BlockSpec((C, 1), const),                     # bb1
            pl.BlockSpec((C, C), const),                     # wb2
        ],
        out_specs=pl.BlockSpec((1, C, HW), lambda n: (n, 0, 0)),
        out_shape=jax.ShapeDtypeStruct((N, C, HW), jnp.float32),
        compiler_params=pltpu.CompilerParams(
            dimension_semantics=("parallel",)),
    )(xr, z3, mean, rstd, wg1, bg1, wg2, wb1, bb1, wb2)


# ----------------------------------------------------------------------------
# Module forward
# ----------------------------------------------------------------------------
def adaptive_instance_norm_2d(params, x, z, eps=1e-5):
    # x: (N, C, H, W) NCHW like the PyTorch module; z: (N, z_dim)
    N, C, H, W = x.shape
    xr = x.astype(jnp.float32).reshape(N, C, H * W)      # free reshape, stays NCHW
    z3 = z.astype(jnp.float32)[:, :, None]               # (N, Z, 1) per-batch column
    mean, rstd = bn_stats(xr, eps=eps)
    out = adain_apply(xr, z3, mean, rstd, params)
    return out.reshape(N, C, H, W)


# ----------------------------------------------------------------------------
# Parameter init (PyTorch-style uniform fan-in) + host-side spectral norm
# ----------------------------------------------------------------------------
def spectral_normalize(w, n_iter=10):
    u = jnp.ones((w.shape[0],), jnp.float32) / math.sqrt(w.shape[0])
    v = jnp.zeros((w.shape[1],), jnp.float32)
    for _ in range(n_iter):
        v = w.T @ u
        v = v / (jnp.linalg.norm(v) + 1e-12)
        u = w @ v
        u = u / (jnp.linalg.norm(u) + 1e-12)
    sigma = u @ (w @ v)
    return w / sigma


def init_adain_params(key, planes, z_dim):
    ks = jax.random.split(key, 6)
    b1 = 1.0 / math.sqrt(float(z_dim))
    b2 = 1.0 / math.sqrt(float(planes))

    def u(k, shape, bound):
        return jax.random.uniform(k, shape, jnp.float32, -bound, bound)

    return {
        "wg1": spectral_normalize(u(ks[0], (planes, z_dim), b1)),  # Linear(z_dim, C).weight
        "bg1": u(ks[1], (planes,), b1),                            # its bias (not SN'd)
        "wg2": spectral_normalize(u(ks[2], (planes, planes), b2)), # Linear(C, C, bias=False)
        "wb1": spectral_normalize(u(ks[3], (planes, z_dim), b1)),
        "bb1": u(ks[4], (planes,), b1),
        "wb2": spectral_normalize(u(ks[5], (planes, planes), b2)),
    }


# ----------------------------------------------------------------------------
# Pure-JAX reference (mirrors the kernel's bf16 rounding of MXU inputs)
# ----------------------------------------------------------------------------
def reference(params, x, z, eps=1e-5):
    xf = x.astype(jnp.float32)
    mean = jnp.mean(xf, axis=(0, 2, 3), keepdims=True)
    var = jnp.mean(xf * xf, axis=(0, 2, 3), keepdims=True) - mean * mean
    rstd = 1.0 / jnp.sqrt(jnp.maximum(var, 0.0) + eps)
    xhat = (xf - mean) * rstd

    def mlp(w1, b1, w2):
        zb = z.astype(jnp.bfloat16).astype(jnp.float32)
        w1b = w1.astype(jnp.bfloat16).astype(jnp.float32)
        w2b = w2.astype(jnp.bfloat16).astype(jnp.float32)
        h = jnp.maximum(zb @ w1b.T + b1, 0.0)
        h = h.astype(jnp.bfloat16).astype(jnp.float32)
        return h @ w2b.T

    gamma = mlp(params["wg1"], params["bg1"], params["wg2"])   # (N, C)
    beta = mlp(params["wb1"], params["bb1"], params["wb2"])    # (N, C)
    return gamma[:, :, None, None] * xhat + beta[:, :, None, None]


if __name__ == "__main__":
    key = jax.random.PRNGKey(0)
    kx, kz, kp = jax.random.split(key, 3)

    N, C, H, W, Z = 4, 128, 16, 16, 128     # planes=128, z_dim=128 (module default)
    x = jax.random.normal(kx, (N, C, H, W), jnp.float32)
    z = jax.random.normal(kz, (N, Z), jnp.float32)
    params = init_adain_params(kp, C, Z)

    out = adaptive_instance_norm_2d(params, x, z)
    jax.block_until_ready(out)

    ref = reference(params, x, z)
    assert out.shape == (N, C, H, W) and out.dtype == jnp.float32
    assert bool(jnp.allclose(out, ref, atol=2e-3, rtol=2e-3))
    print("KERNEL_OK")
</pallas_src>

<mosaic_0001>
module attributes {stable_mosaic.version = 11 : i64} {
  func.func @_bn_stats_kernel(%arg0: i32, %arg1: memref<1x128x256xf32, #tpu.memory_space<vmem>>, %arg2: memref<128x1xf32, #tpu.memory_space<vmem>>, %arg3: memref<128x1xf32, #tpu.memory_space<vmem>>) attributes {dimension_semantics = [#tpu.dimension_semantics<arbitrary>], iteration_bounds = array<i64: 4>, scalar_prefetch = 0 : i64, scratch_operands = 0 : i64, tpu.core_type = #tpu.core_type<tc>, window_params = [{transform_indices = @transform_0, window_bounds = array<i64: 1, 128, 256>}, {pipeline_mode = #tpu.pipeline_mode<synchronous>, transform_indices = @transform_1, window_bounds = array<i64: 128, 1>}, {pipeline_mode = #tpu.pipeline_mode<synchronous>, transform_indices = @transform_2, window_bounds = array<i64: 128, 1>}]} {
    %c0_i32 = arith.constant 0 : i32
    %0 = arith.cmpi eq, %arg0, %c0_i32 : i32
    %1 = arith.extui %0 : i1 to i32
    %c0_i32_0 = arith.constant 0 : i32
    %2 = arith.cmpi ne, %1, %c0_i32_0 : i32
    scf.if %2 {
      %cst_13 = arith.constant 0.000000e+00 : f32
      %19 = vector.broadcast %cst_13 : f32 to vector<128x1xf32>
      %c0_14 = arith.constant 0 : index
      %c0_15 = arith.constant 0 : index
      %20 = vector.load %arg2[%c0_14, %c0_15] : memref<128x1xf32, #tpu.memory_space<vmem>>, vector<128x1xf32>
      tpu.vector_store %arg2[%c0_14, %c0_15], %19 {strides = array<i32>} : memref<128x1xf32, #tpu.memory_space<vmem>>, vector<128x1xf32>,
      %cst_16 = arith.constant 0.000000e+00 : f32
      %21 = vector.broadcast %cst_16 : f32 to vector<128x1xf32>
      %c0_17 = arith.constant 0 : index
      %c0_18 = arith.constant 0 : index
      %22 = vector.load %arg3[%c0_17, %c0_18] : memref<128x1xf32, #tpu.memory_space<vmem>>, vector<128x1xf32>
      tpu.vector_store %arg3[%c0_17, %c0_18], %21 {strides = array<i32>} : memref<128x1xf32, #tpu.memory_space<vmem>>, vector<128x1xf32>,
    } else {
    }
    %c0 = arith.constant 0 : index
    %c0_1 = arith.constant 0 : index
    %c0_2 = arith.constant 0 : index
    %3 = vector.load %arg1[%c0, %c0_1, %c0_2] : memref<1x128x256xf32, #tpu.memory_space<vmem>>, vector<1x128x256xf32>
    %4 = vector.shape_cast %3 : vector<1x128x256xf32> to vector<128x256xf32>
    %c0_3 = arith.constant 0 : index
    %c0_4 = arith.constant 0 : index
    %5 = vector.load %arg2[%c0_3, %c0_4] : memref<128x1xf32, #tpu.memory_space<vmem>>, vector<128x1xf32>
    %cst = arith.constant dense<0.000000e+00> : vector<128xf32>
    %6 = vector.multi_reduction <add>, %4, %cst [1] : vector<128x256xf32> to vector<128xf32>
    %7 = vector.shape_cast %6 : vector<128xf32> to vector<128x1xf32>
    %8 = arith.addf %5, %7 : vector<128x1xf32>
    %c0_5 = arith.constant 0 : index
    %c0_6 = arith.constant 0 : index
    %9 = vector.load %arg2[%c0_5, %c0_6] : memref<128x1xf32, #tpu.memory_space<vmem>>, vector<128x1xf32>
    tpu.vector_store %arg2[%c0_5, %c0_6], %8 {strides = array<i32>} : memref<128x1xf32, #tpu.memory_space<vmem>>, vector<128x1xf32>,
    %c0_7 = arith.constant 0 : index
    %c0_8 = arith.constant 0 : index
    %10 = vector.load %arg3[%c0_7, %c0_8] : memref<128x1xf32, #tpu.memory_space<vmem>>, vector<128x1xf32>
    %11 = arith.mulf %4, %4 : vector<128x256xf32>
    %cst_9 = arith.constant dense<0.000000e+00> : vector<128xf32>
    %12 = vector.multi_reduction <add>, %11, %cst_9 [1] : vector<128x256xf32> to vector<128xf32>
    %13 = vector.shape_cast %12 : vector<128xf32> to vector<128x1xf32>
    %14 = arith.addf %10, %13 : vector<128x1xf32>
    %c0_10 = arith.constant 0 : index
    %c0_11 = arith.constant 0 : index
    %15 = vector.load %arg3[%c0_10, %c0_11] : memref<128x1xf32, #tpu.memory_space<vmem>>, vector<128x1xf32>
    tpu.vector_store %arg3[%c0_10, %c0_11], %14 {strides = array<i32>} : memref<128x1xf32, #tpu.memory_space<vmem>>, vector<128x1xf32>,
    %c3_i32 = arith.constant 3 : i32
    %16 = arith.cmpi eq, %arg0, %c3_i32 : i32
    %17 = arith.extui %16 : i1 to i32
    %c0_i32_12 = arith.constant 0 : i32
    %18 = arith.cmpi ne, %17, %c0_i32_12 : i32
    scf.if %18 {
      %c0_13 = arith.constant 0 : index
      %c0_14 = arith.constant 0 : index
      %19 = vector.load %arg2[%c0_13, %c0_14] : memref<128x1xf32, #tpu.memory_space<vmem>>, vector<128x1xf32>
      %cst_15 = arith.constant 9.765625E-4 : f32
      %20 = vector.broadcast %cst_15 : f32 to vector<128x1xf32>
      %21 = arith.mulf %19, %20 : vector<128x1xf32>
      %c0_16 = arith.constant 0 : index
      %c0_17 = arith.constant 0 : index
      %22 = vector.load %arg3[%c0_16, %c0_17] : memref<128x1xf32, #tpu.memory_space<vmem>>, vector<128x1xf32>
      %cst_18 = arith.constant 9.765625E-4 : f32
      %23 = vector.broadcast %cst_18 : f32 to vector<128x1xf32>
      %24 = arith.mulf %22, %23 : vector<128x1xf32>
      %25 = arith.mulf %21, %21 : vector<128x1xf32>
      %26 = arith.subf %24, %25 : vector<128x1xf32>
      %cst_19 = arith.constant 0.000000e+00 : f32
      %27 = vector.broadcast %cst_19 : f32 to vector<128x1xf32>
      %28 = arith.maximumf %26, %27 : vector<128x1xf32>
      %c0_20 = arith.constant 0 : index
      %c0_21 = arith.constant 0 : index
      %29 = vector.load %arg2[%c0_20, %c0_21] : memref<128x1xf32, #tpu.memory_space<vmem>>, vector<128x1xf32>
      tpu.vector_store %arg2[%c0_20, %c0_21], %21 {strides = array<i32>} : memref<128x1xf32, #tpu.memory_space<vmem>>, vector<128x1xf32>,
      %cst_22 = arith.constant 9.99999974E-6 : f32
      %30 = vector.broadcast %cst_22 : f32 to vector<128x1xf32>
      %31 = arith.addf %28, %30 : vector<128x1xf32>
      %32 = math.rsqrt %31 : vector<128x1xf32>
      %c0_23 = arith.constant 0 : index
      %c0_24 = arith.constant 0 : index
      %33 = vector.load %arg3[%c0_23, %c0_24] : memref<128x1xf32, #tpu.memory_space<vmem>>, vector<128x1xf32>
      tpu.vector_store %arg3[%c0_23, %c0_24], %32 {strides = array<i32>} : memref<128x1xf32, #tpu.memory_space<vmem>>, vector<128x1xf32>,
    } else {
    }
    return
  }
  func.func @transform_0(%arg0: i32) -> (i32, i32, i32) {
    %c0_i32 = arith.constant 0 : i32
    %c0_i32_0 = arith.constant 0 : i32
    %c0_i32_1 = arith.constant 0 : i32
    return %arg0, %c0_i32, %c0_i32_0 : i32, i32, i32
  }
  func.func @transform_1(%arg0: i32) -> (i32, i32) {
    %c0_i32 = arith.constant 0 : i32
    %c0_i32_0 = arith.constant 0 : i32
    %c0_i32_1 = arith.constant 0 : i32
    return %c0_i32, %c0_i32_0 : i32, i32
  }
  func.func @transform_2(%arg0: i32) -> (i32, i32) {
    %c0_i32 = arith.constant 0 : i32
    %c0_i32_0 = arith.constant 0 : i32
    %c0_i32_1 = arith.constant 0 : i32
    return %c0_i32, %c0_i32_0 : i32, i32
  }
}

</mosaic_0001>

<llo_original>
// kernel: tpu_custom_call.1
$region0: #{tpu_custom_call.1}
  #allocation0 [shape = 'u32[]', space=smem, size = 0x4, offset = 0x4, fixed_abs, tag = 'smem constant byte address 0x4 - core index']
  #allocation1 [shape = 'u32[144,128]{1,0:T(1,128)}', space=vmem, size = 0x12000, scoped, tag = 'internal scratch']
  %s0 = inlined_call_operand.hbm [shape: f32[4,128,256], index: 0, kind: input, shape index: {}]
  %s1 = inlined_call_operand.vmem [shape: f32[128,1], index: 1, kind: output, shape index: {0}]
  %s2 = inlined_call_operand.vmem [shape: f32[128,1], index: 2, kind: output, shape index: {1}]
  %3 = xla_tuple %s1, %s2
  %s4 = sld [smem:[#allocation0]]
  $region57: #{tpu_custom_call.1} parent=0
    _
  %s6 = ssub.s32 1, %s4
  %s7 = scalar_select 0, %s6, %s4
  $region1: #{tpu_custom_call.1} parent=0
    #allocation2 [shape = 'u8[262144]{0}', space=vmem, size = 0x40000, scoped, tag = 'input window, operand 0']
    #allocation3 [shape = 's32[2]{0}', space=sflag, size = 0x8, scoped, tag = 'scoped memory for tpu_custom_call.1']
    %8 = vsyncpa [#allocation3], 0
    %s9 = scalar_lea.sflag [#allocation3], 1
    %10 = vsyncpa %s9, 0
    loop: start=0, step=1, limit=6
    $region2: #{tpu_custom_call.1} parent=1 // loop_pre_header
      _
    $region3: #{tpu_custom_call.1} parent=1 // loop_header
      %s12 = sphi 0, %s16
      %p13 = scmp.ge.s32.totalorder %s12, 6
      %s22 = sphi 0, %s24
      %s25 = sphi 0, %s22
      %s26 = sphi 0, %s25
      %s42 = sphi 0, %s26
      %s46 = sphi 0, %s46
      %s48 = sphi 0, %s46
      %s49 = sphi 0, %s48
      %s63 = sphi 0, %s49
      %s67 = sphi 0, %s67
      %s69 = sphi 0, %s67
      %s70 = sphi 0, %s69
      %s84 = sphi 0, %s70
    $region4: #{tpu_custom_call.1} parent=1 // loop_header_branch
      %15 = sbr.rel (%p13) target = $region8
    $region5: #{tpu_custom_call.1} parent=1 // loop_body
      %s17 = ssub.s32 %s12, 1
      %s18 = ssub.s32 %s12, 2
      %s19 = sadd.s32 %s12, 1
      %s20 = ssub.s32 %s12, %s19
      %p21 = scmp.eq.s32.totalorder %s20, 0
      %s23 = sadd.s32 %s22, 1
      %s24 = scalar_select %p21, %s22, %s23
      %p27 = pneg %p21
      %p28 = scmp.eq.s32.totalorder %s12, 3
      %p29 = por %p27, %p28
      %p30 = scmp.ne.s32.totalorder %s22, %s25
      %p31 = scmp.eq.s32.totalorder %s12, 0
      %p32 = por %p30, %p31
      %p33 = scmp.ne.s32.totalorder %s22, %s25
      %p34 = scmp.eq.s32.totalorder %s17, 3
      %p35 = por %p33, %p34
      %p36 = scmp.ne.s32.totalorder %s25, %s26
      %p37 = scmp.eq.s32.totalorder %s17, 0
      %p38 = por %p36, %p37
      %p39 = scmp.ne.s32.totalorder %s25, %s26
      %p40 = scmp.eq.s32.totalorder %s18, 3
      %p41 = por %p39, %p40
      %p43 = scmp.ne.s32.totalorder %s26, %s42
      %p44 = scmp.eq.s32.totalorder %s18, 0
      %p45 = por %p43, %p44
      %s47 = sadd.s32 %s46, 1
      %p50 = scmp.eq.s32.totalorder %s12, 3
      %p51 = scmp.ne.s32.totalorder %s46, %s48
      %p52 = scmp.eq.s32.totalorder %s12, 0
      %p53 = por %p51, %p52
      %p54 = scmp.ne.s32.totalorder %s46, %s48
      %p55 = scmp.eq.s32.totalorder %s17, 3
      %p56 = por %p54, %p55
      %p57 = scmp.ne.s32.totalorder %s48, %s49
      %p58 = scmp.eq.s32.totalorder %s17, 0
      %p59 = por %p57, %p58
      %p60 = scmp.ne.s32.totalorder %s48, %s49
      %p61 = scmp.eq.s32.totalorder %s18, 3
      %p62 = por %p60, %p61
      %p64 = scmp.ne.s32.totalorder %s49, %s63
      %p65 = scmp.eq.s32.totalorder %s18, 0
      %p66 = por %p64, %p65
      %s68 = sadd.s32 %s67, 1
      %p71 = scmp.eq.s32.totalorder %s12, 3
      %p72 = scmp.ne.s32.totalorder %s67, %s69
      %p73 = scmp.eq.s32.totalorder %s12, 0
      %p74 = por %p72, %p73
      %p75 = scmp.ne.s32.totalorder %s67, %s69
      %p76 = scmp.eq.s32.totalorder %s17, 3
      %p77 = por %p75, %p76
      %p78 = scmp.ne.s32.totalorder %s69, %s70
      %p79 = scmp.eq.s32.totalorder %s17, 0
      %p80 = por %p78, %p79
      %p81 = scmp.ne.s32.totalorder %s69, %s70
      %p82 = scmp.eq.s32.totalorder %s18, 3
      %p83 = por %p81, %p82
      %p85 = scmp.ne.s32.totalorder %s70, %s84
      %p86 = scmp.eq.s32.totalorder %s18, 0
      %p87 = por %p85, %p86
      %p88 = scmp.le.s32.totalorder 1, %s12
      %p89 = scmp.lt.s32.totalorder %s12, 5
      %p90 = pnand %p88, %p89
      %p91 = pneg %p90
      // Predicated region
      $region9: #{tpu_custom_call.1} parent=5 // pred_check
        _
      $region10: #{tpu_custom_call.1} parent=5 // pred_check_branch
        %93 = sbr.rel (%p90) target = $region12
      $region11: #{tpu_custom_call.1} parent=5 // pred_region
        %s94 = ssub.s32 %s12, 1
      $region12: #{tpu_custom_call.1} parent=5 // pred_fallthru
        _
      %p95 = scmp.lt.s32.totalorder %s12, 4
      // Predicated region
      $region13: #{tpu_custom_call.1} parent=5 // pred_check
        %p96 = pneg %p95
      $region14: #{tpu_custom_call.1} parent=5 // pred_check_branch
        %98 = sbr.rel (%p96) target = $region16
      $region15: #{tpu_custom_call.1} parent=5 // pred_region
        // Predicated region
        $region17: #{tpu_custom_call.1} parent=15 // pred_check
          %p99 = pneg %p32
        $region18: #{tpu_custom_call.1} parent=15 // pred_check_branch
          %101 = sbr.rel (%p99) target = $region20
        $region19: #{tpu_custom_call.1} parent=15 // pred_region
          %s102 = sand.u32 %s22, 1
          %s103 = scalar_lea.sflag [#allocation3], %s102
          %s104 = sand.u32 %s22, 1
          %s105 = smul.addr %s104, 256
          %s106 = scalar_lea.vmem [#allocation2], %s105
          %s108 = ssub.s32 4096, 4096
          %109 = vsyncadd %s103, %s108
          %s110 = smul.addr %s12, 32
          %s111 = smul.addr %s110, 128
          %s112 = scalar_lea.hbm %s0, %s111
          %s113 = sshll.u32 %s106, 4
          %s114 = int_to_ptr.vmem [resolvable:$true] %s113
          %119 = dma.hbm_to_vmem [thread:$0]  %s112, 4096, %s114, %s103, 256, 256, 16
        $region20: #{tpu_custom_call.1} parent=15 // pred_fallthru
          _
      $region16: #{tpu_custom_call.1} parent=5 // pred_fallthru
        _
      %p120 = scmp.le.s32.totalorder 1, %s12
      %p121 = scmp.lt.s32.totalorder %s12, 5
      %p122 = pnand %p120, %p121
      %p123 = pneg %p122
      // Predicated region
      $region21: #{tpu_custom_call.1} parent=5 // pred_check
        _
      $region22: #{tpu_custom_call.1} parent=5 // pred_check_branch
        %125 = sbr.rel (%p122) target = $region24
      $region23: #{tpu_custom_call.1} parent=5 // pred_region
        %s126 = ssub.s32 %s12, 1
        %s127 = sand.u32 %s25, 1
        %s128 = scalar_lea.sflag [#allocation3], %s127
        %s129 = sand.u32 %s25, 1
        %s130 = smul.addr %s129, 256
        %s131 = scalar_lea.vmem [#allocation2], %s130
        // Predicated region
        $region25: #{tpu_custom_call.1} parent=23 // pred_check
          %p132 = pneg %p38
        $region26: #{tpu_custom_call.1} parent=23 // pred_check_branch
          %134 = sbr.rel (%p132) target = $region28
        $region27: #{tpu_custom_call.1} parent=23 // pred_region
          %135 = dma.done %s128, 4096
        $region28: #{tpu_custom_call.1} parent=23 // pred_fallthru
          _
        %s136 = sand.u32 %s25, 1
        %s137 = scalar_lea.sflag [#allocation3], %s136
        %s138 = sand.u32 %s25, 1
        %s139 = smul.addr %s138, 256
        %s140 = scalar_lea.vmem [#allocation2], %s139
        %p141 = pneg %p38
        %p142 = pneg %p35
        %p143 = pneg %p59
        %p144 = pneg %p56
        %p145 = pneg %p80
        %p146 = pneg %p77
        %p147 = scmp.eq.s32.totalorder %s17, 0
        // Predicated region
        $region29: #{tpu_custom_call.1} parent=23 // pred_check
          %p148 = pneg %p147
        $region30: #{tpu_custom_call.1} parent=23 // pred_check_branch
          %150 = sbr.rel (%p148) target = $region32
        $region31: #{tpu_custom_call.1} parent=23 // pred_region
          %vm151 = vcmask 7168
          %152 = vst.msk [vmem:[%s1] sm:$0xff] %vm151, 0.0
          %153 = vst.msk [vmem:[%s1 + $0x8] sm:$0xff] %vm151, 0.0
          %154 = vst.msk [vmem:[%s1 + $0x10] sm:$0xff] %vm151, 0.0
          %155 = vst.msk [vmem:[%s1 + $0x18] sm:$0xff] %vm151, 0.0
          %156 = vst.msk [vmem:[%s1 + $0x20] sm:$0xff] %vm151, 0.0
          %157 = vst.msk [vmem:[%s1 + $0x28] sm:$0xff] %vm151, 0.0
          %158 = vst.msk [vmem:[%s1 + $0x30] sm:$0xff] %vm151, 0.0
          %159 = vst.msk [vmem:[%s1 + $0x38] sm:$0xff] %vm151, 0.0
          %160 = vst.msk [vmem:[%s1 + $0x40] sm:$0xff] %vm151, 0.0
          %161 = vst.msk [vmem:[%s1 + $0x48] sm:$0xff] %vm151, 0.0
          %162 = vst.msk [vmem:[%s1 + $0x50] sm:$0xff] %vm151, 0.0
          %163 = vst.msk [vmem:[%s1 + $0x58] sm:$0xff] %vm151, 0.0
          %164 = vst.msk [vmem:[%s1 + $0x60] sm:$0xff] %vm151, 0.0
          %165 = vst.msk [vmem:[%s1 + $0x68] sm:$0xff] %vm151, 0.0
          %166 = vst.msk [vmem:[%s1 + $0x70] sm:$0xff] %vm151, 0.0
          %167 = vst.msk [vmem:[%s1 + $0x78] sm:$0xff] %vm151, 0.0
          %168 = vst.msk [vmem:[%s2] sm:$0xff] %vm151, 0.0
          %169 = vst.msk [vmem:[%s2 + $0x8] sm:$0xff] %vm151, 0.0
          %170 = vst.msk [vmem:[%s2 + $0x10] sm:$0xff] %vm151, 0.0
          %171 = vst.msk [vmem:[%s2 + $0x18] sm:$0xff] %vm151, 0.0
          %172 = vst.msk [vmem:[%s2 + $0x20] sm:$0xff] %vm151, 0.0
          %173 = vst.msk [vmem:[%s2 + $0x28] sm:$0xff] %vm151, 0.0
          %174 = vst.msk [vmem:[%s2 + $0x30] sm:$0xff] %vm151, 0.0
          %175 = vst.msk [vmem:[%s2 + $0x38] sm:$0xff] %vm151, 0.0
          %176 = vst.msk [vmem:[%s2 + $0x40] sm:$0xff] %vm151, 0.0
          %177 = vst.msk [vmem:[%s2 + $0x48] sm:$0xff] %vm151, 0.0
          %178 = vst.msk [vmem:[%s2 + $0x50] sm:$0xff] %vm151, 0.0
          %179 = vst.msk [vmem:[%s2 + $0x58] sm:$0xff] %vm151, 0.0
          %180 = vst.msk [vmem:[%s2 + $0x60] sm:$0xff] %vm151, 0.0
          %181 = vst.msk [vmem:[%s2 + $0x68] sm:$0xff] %vm151, 0.0
          %182 = vst.msk [vmem:[%s2 + $0x70] sm:$0xff] %vm151, 0.0
          %183 = vst.msk [vmem:[%s2 + $0x78] sm:$0xff] %vm151, 0.0
        $region32: #{tpu_custom_call.1} parent=23 // pred_fallthru
          _
        %v184 = vld [vmem:[%s131] sm:$0xff]
        %v185 = vld [vmem:[%s131 + $0x8] sm:$0xff]
        %v186 = vld [vmem:[%s131 + $0x10] sm:$0xff]
        %v187 = vld [vmem:[%s131 + $0x18] sm:$0xff]
        %v188 = vld [vmem:[%s131 + $0x20] sm:$0xff]
        %v189 = vld [vmem:[%s131 + $0x28] sm:$0xff]
        %v190 = vld [vmem:[%s131 + $0x30] sm:$0xff]
        %v191 = vld [vmem:[%s131 + $0x38] sm:$0xff]
        %v192 = vld [vmem:[%s131 + $0x40] sm:$0xff]
        %v193 = vld [vmem:[%s131 + $0x48] sm:$0xff]
        %v194 = vld [vmem:[%s131 + $0x50] sm:$0xff]
        %v195 = vld [vmem:[%s131 + $0x58] sm:$0xff]
        %v196 = vld [vmem:[%s131 + $0x60] sm:$0xff]
        %v197 = vld [vmem:[%s131 + $0x68] sm:$0xff]
        %v198 = vld [vmem:[%s131 + $0x70] sm:$0xff]
        %v199 = vld [vmem:[%s131 + $0x78] sm:$0xff]
        %v200 = vld [vmem:[%s131 + $0x80] sm:$0xff]
        %v201 = vld [vmem:[%s131 + $0x88] sm:$0xff]
        %v202 = vld [vmem:[%s131 + $0x90] sm:$0xff]
        %v203 = vld [vmem:[%s131 + $0x98] sm:$0xff]
        %v204 = vld [vmem:[%s131 + $0xa0] sm:$0xff]
        %v205 = vld [vmem:[%s131 + $0xa8] sm:$0xff]
        %v206 = vld [vmem:[%s131 + $0xb0] sm:$0xff]
        %v207 = vld [vmem:[%s131 + $0xb8] sm:$0xff]
        %v208 = vld [vmem:[%s131 + $0xc0] sm:$0xff]
        %v209 = vld [vmem:[%s131 + $0xc8] sm:$0xff]
        %v210 = vld [vmem:[%s131 + $0xd0] sm:$0xff]
        %v211 = vld [vmem:[%s131 + $0xd8] sm:$0xff]
        %v212 = vld [vmem:[%s131 + $0xe0] sm:$0xff]
        %v213 = vld [vmem:[%s131 + $0xe8] sm:$0xff]
        %v214 = vld [vmem:[%s131 + $0xf0] sm:$0xff]
        %v215 = vld [vmem:[%s131 + $0xf8] sm:$0xff]
        %v216 = vld [vmem:[%s1] sm:$0xff]
        %v217 = vld [vmem:[%s1 + $0x8] sm:$0xff]
        %v218 = vld [vmem:[%s1 + $0x10] sm:$0xff]
        %v219 = vld [vmem:[%s1 + $0x18] sm:$0xff]
        %v220 = vld [vmem:[%s1 + $0x20] sm:$0xff]
        %v221 = vld [vmem:[%s1 + $0x28] sm:$0xff]
        %v222 = vld [vmem:[%s1 + $0x30] sm:$0xff]
        %v223 = vld [vmem:[%s1 + $0x38] sm:$0xff]
        %v224 = vld [vmem:[%s1 + $0x40] sm:$0xff]
        %v225 = vld [vmem:[%s1 + $0x48] sm:$0xff]
        %v226 = vld [vmem:[%s1 + $0x50] sm:$0xff]
        %v227 = vld [vmem:[%s1 + $0x58] sm:$0xff]
        %v228 = vld [vmem:[%s1 + $0x60] sm:$0xff]
        %v229 = vld [vmem:[%s1 + $0x68] sm:$0xff]
        %v230 = vld [vmem:[%s1 + $0x70] sm:$0xff]
        %v231 = vld [vmem:[%s1 + $0x78] sm:$0xff]
        %v232 = vadd.f32 %v184, %v185
        %233 = vadd.xlane.f32.xlu0 %v232
        %v234 = vpop.xlane.xlu0 %233
        %v235 = vadd.f32 %v186, %v187
        %236 = vadd.xlane.f32.xlu0 %v235
        %v237 = vpop.xlane.xlu0 %236
        %v238 = vadd.f32 %v188, %v189
        %239 = vadd.xlane.f32.xlu0 %v238
        %v240 = vpop.xlane.xlu0 %239
        %v241 = vadd.f32 %v190, %v191
        %242 = vadd.xlane.f32.xlu0 %v241
        %v243 = vpop.xlane.xlu0 %242
        %v244 = vadd.f32 %v192, %v193
        %245 = vadd.xlane.f32.xlu0 %v244
        %v246 = vpop.xlane.xlu0 %245
        %v247 = vadd.f32 %v194, %v195
        %248 = vadd.xlane.f32.xlu0 %v247
        %v249 = vpop.xlane.xlu0 %248
        %v250 = vadd.f32 %v196, %v197
        %251 = vadd.xlane.f32.xlu0 %v250
        %v252 = vpop.xlane.xlu0 %251
        %v253 = vadd.f32 %v198, %v199
        %254 = vadd.xlane.f32.xlu0 %v253
        %v255 = vpop.xlane.xlu0 %254
        %v256 = vadd.f32 %v200, %v201
        %257 = vadd.xlane.f32.xlu0 %v256
        %v258 = vpop.xlane.xlu0 %257
        %v259 = vadd.f32 %v202, %v203
        %260 = vadd.xlane.f32.xlu0 %v259
        %v261 = vpop.xlane.xlu0 %260
        %v262 = vadd.f32 %v204, %v205
        %263 = vadd.xlane.f32.xlu0 %v262
        %v264 = vpop.xlane.xlu0 %263
        %v265 = vadd.f32 %v206, %v207
        %266 = vadd.xlane.f32.xlu0 %v265
        %v267 = vpop.xlane.xlu0 %266
        %v268 = vadd.f32 %v208, %v209
        %269 = vadd.xlane.f32.xlu0 %v268
        %v270 = vpop.xlane.xlu0 %269
        %v271 = vadd.f32 %v210, %v211
        %272 = vadd.xlane.f32.xlu0 %v271
        %v273 = vpop.xlane.xlu0 %272
        %v274 = vadd.f32 %v212, %v213
        %275 = vadd.xlane.f32.xlu0 %v274
        %v276 = vpop.xlane.xlu0 %275
        %v277 = vadd.f32 %v214, %v215
        %278 = vadd.xlane.f32.xlu0 %v277
        %v279 = vpop.xlane.xlu0 %278
        %v280 = vadd.f32 %v216, %v234
        %v281 = vadd.f32 %v217, %v237
        %v282 = vadd.f32 %v218, %v240
        %v283 = vadd.f32 %v219, %v243
        %v284 = vadd.f32 %v220, %v246
        %v285 = vadd.f32 %v221, %v249
        %v286 = vadd.f32 %v222, %v252
        %v287 = vadd.f32 %v223, %v255
        %v288 = vadd.f32 %v224, %v258
        %v289 = vadd.f32 %v225, %v261
        %v290 = vadd.f32 %v226, %v264
        %v291 = vadd.f32 %v227, %v267
        %v292 = vadd.f32 %v228, %v270
        %v293 = vadd.f32 %v229, %v273
        %v294 = vadd.f32 %v230, %v276
        %v295 = vadd.f32 %v231, %v279
        %vm296 = vcmask 7168
        %297 = vst.msk [vmem:[%s1] sm:$0xff] %vm296, %v280
        %298 = vst.msk [vmem:[%s1 + $0x8] sm:$0xff] %vm296, %v281
        %299 = vst.msk [vmem:[%s1 + $0x10] sm:$0xff] %vm296, %v282
        %300 = vst.msk [vmem:[%s1 + $0x18] sm:$0xff] %vm296, %v283
        %301 = vst.msk [vmem:[%s1 + $0x20] sm:$0xff] %vm296, %v284
        %302 = vst.msk [vmem:[%s1 + $0x28] sm:$0xff] %vm296, %v285
        %303 = vst.msk [vmem:[%s1 + $0x30] sm:$0xff] %vm296, %v286
        %304 = vst.msk [vmem:[%s1 + $0x38] sm:$0xff] %vm296, %v287
        %305 = vst.msk [vmem:[%s1 + $0x40] sm:$0xff] %vm296, %v288
        %306 = vst.msk [vmem:[%s1 + $0x48] sm:$0xff] %vm296, %v289
        %307 = vst.msk [vmem:[%s1 + $0x50] sm:$0xff] %vm296, %v290
        %308 = vst.msk [vmem:[%s1 + $0x58] sm:$0xff] %vm296, %v291
        %309 = vst.msk [vmem:[%s1 + $0x60] sm:$0xff] %vm296, %v292
        %310 = vst.msk [vmem:[%s1 + $0x68] sm:$0xff] %vm296, %v293
        %311 = vst.msk [vmem:[%s1 + $0x70] sm:$0xff] %vm296, %v294
        %312 = vst.msk [vmem:[%s1 + $0x78] sm:$0xff] %vm296, %v295
        %v313 = vld [vmem:[%s2] sm:$0xff]
        %v314 = vld [vmem:[%s2 + $0x8] sm:$0xff]
        %v315 = vld [vmem:[%s2 + $0x10] sm:$0xff]
        %v316 = vld [vmem:[%s2 + $0x18] sm:$0xff]
        %v317 = vld [vmem:[%s2 + $0x20] sm:$0xff]
        %v318 = vld [vmem:[%s2 + $0x28] sm:$0xff]
        %v319 = vld [vmem:[%s2 + $0x30] sm:$0xff]
        %v320 = vld [vmem:[%s2 + $0x38] sm:$0xff]
        %v321 = vld [vmem:[%s2 + $0x40] sm:$0xff]
        %v322 = vld [vmem:[%s2 + $0x48] sm:$0xff]
        %v323 = vld [vmem:[%s2 + $0x50] sm:$0xff]
        %v324 = vld [vmem:[%s2 + $0x58] sm:$0xff]
        %v325 = vld [vmem:[%s2 + $0x60] sm:$0xff]
        %v326 = vld [vmem:[%s2 + $0x68] sm:$0xff]
        %v327 = vld [vmem:[%s2 + $0x70] sm:$0xff]
        %v328 = vld [vmem:[%s2 + $0x78] sm:$0xff]
        %v329 = vmul.f32 %v184, %v184
        %v330 = vmul.f32 %v185, %v185
        %v331 = vmul.f32 %v186, %v186
        %v332 = vmul.f32 %v187, %v187
        %v333 = vmul.f32 %v188, %v188
        %v334 = vmul.f32 %v189, %v189
        %v335 = vmul.f32 %v190, %v190
        %v336 = vmul.f32 %v191, %v191
        %v337 = vmul.f32 %v192, %v192
        %v338 = vmul.f32 %v193, %v193
        %v339 = vmul.f32 %v194, %v194
        %v340 = vmul.f32 %v195, %v195
        %v341 = vmul.f32 %v196, %v196
        %v342 = vmul.f32 %v197, %v197
        %v343 = vmul.f32 %v198, %v198
        %v344 = vmul.f32 %v199, %v199
        %v345 = vmul.f32 %v200, %v200
        %v346 = vmul.f32 %v201, %v201
        %v347 = vmul.f32 %v202, %v202
        %v348 = vmul.f32 %v203, %v203
        %v349 = vmul.f32 %v204, %v204
        %v350 = vmul.f32 %v205, %v205
        %v351 = vmul.f32 %v206, %v206
        %v352 = vmul.f32 %v207, %v207
        %v353 = vmul.f32 %v208, %v208
        %v354 = vmul.f32 %v209, %v209
        %v355 = vmul.f32 %v210, %v210
        %v356 = vmul.f32 %v211, %v211
        %v357 = vmul.f32 %v212, %v212
        %v358 = vmul.f32 %v213, %v213
        %v359 = vmul.f32 %v214, %v214
        %v360 = vmul.f32 %v215, %v215
        %v361 = vadd.f32 %v329, %v330
        %362 = vadd.xlane.f32.xlu0 %v361
        %v363 = vpop.xlane.xlu0 %362
        %v364 = vadd.f32 %v331, %v332
        %365 = vadd.xlane.f32.xlu0 %v364
        %v366 = vpop.xlane.xlu0 %365
        %v367 = vadd.f32 %v333, %v334
        %368 = vadd.xlane.f32.xlu0 %v367
        %v369 = vpop.xlane.xlu0 %368
        %v370 = vadd.f32 %v335, %v336
        %371 = vadd.xlane.f32.xlu0 %v370
        %v372 = vpop.xlane.xlu0 %371
        %v373 = vadd.f32 %v337, %v338
        %374 = vadd.xlane.f32.xlu0 %v373
        %v375 = vpop.xlane.xlu0 %374
        %v376 = vadd.f32 %v339, %v340
        %377 = vadd.xlane.f32.xlu0 %v376
        %v378 = vpop.xlane.xlu0 %377
        %v379 = vadd.f32 %v341, %v342
        %380 = vadd.xlane.f32.xlu0 %v379
        %v381 = vpop.xlane.xlu0 %380
        %v382 = vadd.f32 %v343, %v344
        %383 = vadd.xlane.f32.xlu0 %v382
        %v384 = vpop.xlane.xlu0 %383
        %v385 = vadd.f32 %v345, %v346
        %386 = vadd.xlane.f32.xlu0 %v385
        %v387 = vpop.xlane.xlu0 %386
        %v388 = vadd.f32 %v347, %v348
        %389 = vadd.xlane.f32.xlu0 %v388
        %v390 = vpop.xlane.xlu0 %389
        %v391 = vadd.f32 %v349, %v350
        %392 = vadd.xlane.f32.xlu0 %v391
        %v393 = vpop.xlane.xlu0 %392
        %v394 = vadd.f32 %v351, %v352
        %395 = vadd.xlane.f32.xlu0 %v394
        %v396 = vpop.xlane.xlu0 %395
        %v397 = vadd.f32 %v353, %v354
        %398 = vadd.xlane.f32.xlu0 %v397
        %v399 = vpop.xlane.xlu0 %398
        %v400 = vadd.f32 %v355, %v356
        %401 = vadd.xlane.f32.xlu0 %v400
        %v402 = vpop.xlane.xlu0 %401
        %v403 = vadd.f32 %v357, %v358
        %404 = vadd.xlane.f32.xlu0 %v403
        %v405 = vpop.xlane.xlu0 %404
        %v406 = vadd.f32 %v359, %v360
        %407 = vadd.xlane.f32.xlu0 %v406
        %v408 = vpop.xlane.xlu0 %407
        %v409 = vadd.f32 %v313, %v363
        %v410 = vadd.f32 %v314, %v366
        %v411 = vadd.f32 %v315, %v369
        %v412 = vadd.f32 %v316, %v372
        %v413 = vadd.f32 %v317, %v375
        %v414 = vadd.f32 %v318, %v378
        %v415 = vadd.f32 %v319, %v381
        %v416 = vadd.f32 %v320, %v384
        %v417 = vadd.f32 %v321, %v387
        %v418 = vadd.f32 %v322, %v390
        %v419 = vadd.f32 %v323, %v393
        %v420 = vadd.f32 %v324, %v396
        %v421 = vadd.f32 %v325, %v399
        %v422 = vadd.f32 %v326, %v402
        %v423 = vadd.f32 %v327, %v405
        %v424 = vadd.f32 %v328, %v408
        %425 = vst.msk [vmem:[%s2] sm:$0xff] %vm296, %v409
        %426 = vst.msk [vmem:[%s2 + $0x8] sm:$0xff] %vm296, %v410
        %427 = vst.msk [vmem:[%s2 + $0x10] sm:$0xff] %vm296, %v411
        %428 = vst.msk [vmem:[%s2 + $0x18] sm:$0xff] %vm296, %v412
        %429 = vst.msk [vmem:[%s2 + $0x20] sm:$0xff] %vm296, %v413
        %430 = vst.msk [vmem:[%s2 + $0x28] sm:$0xff] %vm296, %v414
        %431 = vst.msk [vmem:[%s2 + $0x30] sm:$0xff] %vm296, %v415
        %432 = vst.msk [vmem:[%s2 + $0x38] sm:$0xff] %vm296, %v416
        %433 = vst.msk [vmem:[%s2 + $0x40] sm:$0xff] %vm296, %v417
        %434 = vst.msk [vmem:[%s2 + $0x48] sm:$0xff] %vm296, %v418
        %435 = vst.msk [vmem:[%s2 + $0x50] sm:$0xff] %vm296, %v419
        %436 = vst.msk [vmem:[%s2 + $0x58] sm:$0xff] %vm296, %v420
        %437 = vst.msk [vmem:[%s2 + $0x60] sm:$0xff] %vm296, %v421
        %438 = vst.msk [vmem:[%s2 + $0x68] sm:$0xff] %vm296, %v422
        %439 = vst.msk [vmem:[%s2 + $0x70] sm:$0xff] %vm296, %v423
        %440 = vst.msk [vmem:[%s2 + $0x78] sm:$0xff] %vm296, %v424
        %p441 = scmp.eq.s32.totalorder %s17, 3
        // Predicated region
        $region33: #{tpu_custom_call.1} parent=23 // pred_check
          %p442 = pneg %p441
        $region34: #{tpu_custom_call.1} parent=23 // pred_check_branch
          %444 = sbr.rel (%p442) target = $region36
        $region35: #{tpu_custom_call.1} parent=23 // pred_region
          %v445 = vld [vmem:[%s1] sm:$0xff]
          %v446 = vld [vmem:[%s1 + $0x8] sm:$0xff]
          %v447 = vld [vmem:[%s1 + $0x10] sm:$0xff]
          %v448 = vld [vmem:[%s1 + $0x18] sm:$0xff]
          %v449 = vld [vmem:[%s1 + $0x20] sm:$0xff]
          %v450 = vld [vmem:[%s1 + $0x28] sm:$0xff]
          %v451 = vld [vmem:[%s1 + $0x30] sm:$0xff]
          %v452 = vld [vmem:[%s1 + $0x38] sm:$0xff]
          %v453 = vld [vmem:[%s1 + $0x40] sm:$0xff]
          %v454 = vld [vmem:[%s1 + $0x48] sm:$0xff]
          %v455 = vld [vmem:[%s1 + $0x50] sm:$0xff]
          %v456 = vld [vmem:[%s1 + $0x58] sm:$0xff]
          %v457 = vld [vmem:[%s1 + $0x60] sm:$0xff]
          %v458 = vld [vmem:[%s1 + $0x68] sm:$0xff]
          %v459 = vld [vmem:[%s1 + $0x70] sm:$0xff]
          %v460 = vld [vmem:[%s1 + $0x78] sm:$0xff]
          %v461 = vmul.f32 %v445, 0.0009765625
          %v462 = vmul.f32 %v446, 0.0009765625
          %v463 = vmul.f32 %v447, 0.0009765625
          %v464 = vmul.f32 %v448, 0.0009765625
          %v465 = vmul.f32 %v449, 0.0009765625
          %v466 = vmul.f32 %v450, 0.0009765625
          %v467 = vmul.f32 %v451, 0.0009765625
          %v468 = vmul.f32 %v452, 0.0009765625
          %v469 = vmul.f32 %v453, 0.0009765625
          %v470 = vmul.f32 %v454, 0.0009765625
          %v471 = vmul.f32 %v455, 0.0009765625
          %v472 = vmul.f32 %v456, 0.0009765625
          %v473 = vmul.f32 %v457, 0.0009765625
          %v474 = vmul.f32 %v458, 0.0009765625
          %v475 = vmul.f32 %v459, 0.0009765625
          %v476 = vmul.f32 %v460, 0.0009765625
          %v477 = vld [vmem:[%s2] sm:$0xff]
          %v478 = vld [vmem:[%s2 + $0x8] sm:$0xff]
          %v479 = vld [vmem:[%s2 + $0x10] sm:$0xff]
          %v480 = vld [vmem:[%s2 + $0x18] sm:$0xff]
          %v481 = vld [vmem:[%s2 + $0x20] sm:$0xff]
          %v482 = vld [vmem:[%s2 + $0x28] sm:$0xff]
          %v483 = vld [vmem:[%s2 + $0x30] sm:$0xff]
          %v484 = vld [vmem:[%s2 + $0x38] sm:$0xff]
          %v485 = vld [vmem:[%s2 + $0x40] sm:$0xff]
          %v486 = vld [vmem:[%s2 + $0x48] sm:$0xff]
          %v487 = vld [vmem:[%s2 + $0x50] sm:$0xff]
          %v488 = vld [vmem:[%s2 + $0x58] sm:$0xff]
          %v489 = vld [vmem:[%s2 + $0x60] sm:$0xff]
          %v490 = vld [vmem:[%s2 + $0x68] sm:$0xff]
          %v491 = vld [vmem:[%s2 + $0x70] sm:$0xff]
          %v492 = vld [vmem:[%s2 + $0x78] sm:$0xff]
          %v493 = vmul.f32 %v477, 0.0009765625
          %v494 = vmul.f32 %v478, 0.0009765625
          %v495 = vmul.f32 %v479, 0.0009765625
          %v496 = vmul.f32 %v480, 0.0009765625
          %v497 = vmul.f32 %v481, 0.0009765625
          %v498 = vmul.f32 %v482, 0.0009765625
          %v499 = vmul.f32 %v483, 0.0009765625
          %v500 = vmul.f32 %v484, 0.0009765625
          %v501 = vmul.f32 %v485, 0.0009765625
          %v502 = vmul.f32 %v486, 0.0009765625
          %v503 = vmul.f32 %v487, 0.0009765625
          %v504 = vmul.f32 %v488, 0.0009765625
          %v505 = vmul.f32 %v489, 0.0009765625
          %v506 = vmul.f32 %v490, 0.0009765625
          %v507 = vmul.f32 %v491, 0.0009765625
          %v508 = vmul.f32 %v492, 0.0009765625
          %v509 = vmul.f32 %v461, %v461
          %v510 = vmul.f32 %v462, %v462
          %v511 = vmul.f32 %v463, %v463
          %v512 = vmul.f32 %v464, %v464
          %v513 = vmul.f32 %v465, %v465
          %v514 = vmul.f32 %v466, %v466
          %v515 = vmul.f32 %v467, %v467
          %v516 = vmul.f32 %v468, %v468
          %v517 = vmul.f32 %v469, %v469
          %v518 = vmul.f32 %v470, %v470
          %v519 = vmul.f32 %v471, %v471
          %v520 = vmul.f32 %v472, %v472
          %v521 = vmul.f32 %v473, %v473
          %v522 = vmul.f32 %v474, %v474
          %v523 = vmul.f32 %v475, %v475
          %v524 = vmul.f32 %v476, %v476
          %v525 = vsub.f32 %v493, %v509
          %v526 = vsub.f32 %v494, %v510
          %v527 = vsub.f32 %v495, %v511
          %v528 = vsub.f32 %v496, %v512
          %v529 = vsub.f32 %v497, %v513
          %v530 = vsub.f32 %v498, %v514
          %v531 = vsub.f32 %v499, %v515
          %v532 = vsub.f32 %v500, %v516
          %v533 = vsub.f32 %v501, %v517
          %v534 = vsub.f32 %v502, %v518
          %v535 = vsub.f32 %v503, %v519
          %v536 = vsub.f32 %v504, %v520
          %v537 = vsub.f32 %v505, %v521
          %v538 = vsub.f32 %v506, %v522
          %v539 = vsub.f32 %v507, %v523
          %v540 = vsub.f32 %v508, %v524
          %v541 = vmax.f32 %v525, 0.0
          %v542 = vmax.f32 %v526, 0.0
          %v543 = vmax.f32 %v527, 0.0
          %v544 = vmax.f32 %v528, 0.0
          %v545 = vmax.f32 %v529, 0.0
          %v546 = vmax.f32 %v530, 0.0
          %v547 = vmax.f32 %v531, 0.0
          %v548 = vmax.f32 %v532, 0.0
          %v549 = vmax.f32 %v533, 0.0
          %v550 = vmax.f32 %v534, 0.0
          %v551 = vmax.f32 %v535, 0.0
          %v552 = vmax.f32 %v536, 0.0
          %v553 = vmax.f32 %v537, 0.0
          %v554 = vmax.f32 %v538, 0.0
          %v555 = vmax.f32 %v539, 0.0
          %v556 = vmax.f32 %v540, 0.0
          %557 = vst.msk [vmem:[%s1] sm:$0xff] %vm296, %v461
          %558 = vst.msk [vmem:[%s1 + $0x8] sm:$0xff] %vm296, %v462
          %559 = vst.msk [vmem:[%s1 + $0x10] sm:$0xff] %vm296, %v463
          %560 = vst.msk [vmem:[%s1 + $0x18] sm:$0xff] %vm296, %v464
          %561 = vst.msk [vmem:[%s1 + $0x20] sm:$0xff] %vm296, %v465
          %562 = vst.msk [vmem:[%s1 + $0x28] sm:$0xff] %vm296, %v466
          %563 = vst.msk [vmem:[%s1 + $0x30] sm:$0xff] %vm296, %v467
          %564 = vst.msk [vmem:[%s1 + $0x38] sm:$0xff] %vm296, %v468
          %565 = vst.msk [vmem:[%s1 + $0x40] sm:$0xff] %vm296, %v469
          %566 = vst.msk [vmem:[%s1 + $0x48] sm:$0xff] %vm296, %v470
          %567 = vst.msk [vmem:[%s1 + $0x50] sm:$0xff] %vm296, %v471
          %568 = vst.msk [vmem:[%s1 + $0x58] sm:$0xff] %vm296, %v472
          %569 = vst.msk [vmem:[%s1 + $0x60] sm:$0xff] %vm296, %v473
          %570 = vst.msk [vmem:[%s1 + $0x68] sm:$0xff] %vm296, %v474
          %571 = vst.msk [vmem:[%s1 + $0x70] sm:$0xff] %vm296, %v475
          %572 = vst.msk [vmem:[%s1 + $0x78] sm:$0xff] %vm296, %v476
          %v573 = vadd.f32 %v541, 1e-05
          %v574 = vadd.f32 %v542, 1e-05
          %v575 = vadd.f32 %v543, 1e-05
          %v576 = vadd.f32 %v544, 1e-05
          %v577 = vadd.f32 %v545, 1e-05
          %v578 = vadd.f32 %v546, 1e-05
          %v579 = vadd.f32 %v547, 1e-05
          %v580 = vadd.f32 %v548, 1e-05
          %v581 = vadd.f32 %v549, 1e-05
          %v582 = vadd.f32 %v550, 1e-05
          %v583 = vadd.f32 %v551, 1e-05
          %v584 = vadd.f32 %v552, 1e-05
          %v585 = vadd.f32 %v553, 1e-05
          %v586 = vadd.f32 %v554, 1e-05
          %v587 = vadd.f32 %v555, 1e-05
          %v588 = vadd.f32 %v556, 1e-05
          %v589 = vrsqrt.pop %v573
          %v590 = vrsqrt.pop %v574
          %v591 = vrsqrt.pop %v575
          %v592 = vrsqrt.pop %v576
          %v593 = vrsqrt.pop %v577
          %v594 = vrsqrt.pop %v578
          %v595 = vrsqrt.pop %v579
          %v596 = vrsqrt.pop %v580
          %v597 = vrsqrt.pop %v581
          %v598 = vrsqrt.pop %v582
          %v599 = vrsqrt.pop %v583
          %v600 = vrsqrt.pop %v584
          %v601 = vrsqrt.pop %v585
          %v602 = vrsqrt.pop %v586
          %v603 = vrsqrt.pop %v587
          %v604 = vrsqrt.pop %v588
          %605 = vst.msk [vmem:[%s2] sm:$0xff] %vm296, %v589
          %606 = vst.msk [vmem:[%s2 + $0x8] sm:$0xff] %vm296, %v590
          %607 = vst.msk [vmem:[%s2 + $0x10] sm:$0xff] %vm296, %v591
          %608 = vst.msk [vmem:[%s2 + $0x18] sm:$0xff] %vm296, %v592
          %609 = vst.msk [vmem:[%s2 + $0x20] sm:$0xff] %vm296, %v593
          %610 = vst.msk [vmem:[%s2 + $0x28] sm:$0xff] %vm296, %v594
          %611 = vst.msk [vmem:[%s2 + $0x30] sm:$0xff] %vm296, %v595
          %612 = vst.msk [vmem:[%s2 + $0x38] sm:$0xff] %vm296, %v596
          %613 = vst.msk [vmem:[%s2 + $0x40] sm:$0xff] %vm296, %v597
          %614 = vst.msk [vmem:[%s2 + $0x48] sm:$0xff] %vm296, %v598
          %615 = vst.msk [vmem:[%s2 + $0x50] sm:$0xff] %vm296, %v599
          %616 = vst.msk [vmem:[%s2 + $0x58] sm:$0xff] %vm296, %v600
          %617 = vst.msk [vmem:[%s2 + $0x60] sm:$0xff] %vm296, %v601
          %618 = vst.msk [vmem:[%s2 + $0x68] sm:$0xff] %vm296, %v602
          %619 = vst.msk [vmem:[%s2 + $0x70] sm:$0xff] %vm296, %v603
          %620 = vst.msk [vmem:[%s2 + $0x78] sm:$0xff] %vm296, %v604
        $region36: #{tpu_custom_call.1} parent=23 // pred_fallthru
          _
        // Predicated region
        $region37: #{tpu_custom_call.1} parent=23 // pred_check
          %p621 = pneg %p56
        $region38: #{tpu_custom_call.1} parent=23 // pred_check_branch
          %623 = sbr.rel (%p621) target = $region40
        $region39: #{tpu_custom_call.1} parent=23 // pred_region
          _
        $region40: #{tpu_custom_call.1} parent=23 // pred_fallthru
          _
        // Predicated region
        $region41: #{tpu_custom_call.1} parent=23 // pred_check
          %p624 = pneg %p77
        $region42: #{tpu_custom_call.1} parent=23 // pred_check_branch
          %626 = sbr.rel (%p624) target = $region44
        $region43: #{tpu_custom_call.1} parent=23 // pred_region
          _
        $region44: #{tpu_custom_call.1} parent=23 // pred_fallthru
          _
        // Predicated region
        $region45: #{tpu_custom_call.1} parent=23 // pred_check
          %p627 = pneg %p56
        $region46: #{tpu_custom_call.1} parent=23 // pred_check_branch
          %629 = sbr.rel (%p627) target = $region48
        $region47: #{tpu_custom_call.1} parent=23 // pred_region
          _
        $region48: #{tpu_custom_call.1} parent=23 // pred_fallthru
          _
        // Predicated region
        $region49: #{tpu_custom_call.1} parent=23 // pred_check
          %p630 = pneg %p77
        $region50: #{tpu_custom_call.1} parent=23 // pred_check_branch
          %632 = sbr.rel (%p630) target = $region52
        $region51: #{tpu_custom_call.1} parent=23 // pred_region
          _
        $region52: #{tpu_custom_call.1} parent=23 // pred_fallthru
          _
      $region24: #{tpu_custom_call.1} parent=5 // pred_fallthru
        _
      %p633 = scmp.le.s32.totalorder 2, %s12
      // Predicated region
      $region53: #{tpu_custom_call.1} parent=5 // pred_check
        %p634 = pneg %p633
      $region54: #{tpu_custom_call.1} parent=5 // pred_check_branch
        %636 = sbr.rel (%p634) target = $region56
      $region55: #{tpu_custom_call.1} parent=5 // pred_region
        %s637 = ssub.s32 %s12, 2
      $region56: #{tpu_custom_call.1} parent=5 // pred_fallthru
        _
    $region6: #{tpu_custom_call.1} parent=1 // loop_footer
      %s16 = sadd.s32 1, %s12
    $region7: #{tpu_custom_call.1} parent=1 // loop_footer_branch
      %11 = sbr.rel target = $region3
    $region8: #{tpu_custom_call.1} parent=1 // loop_exit
      _
    %638 = vsyncpa [#allocation3], 1
    %s639 = scalar_lea.sflag [#allocation3], 1
    %640 = vsyncpa %s639, 1

</llo_original>
